<compile_context>
chip_gen: v6e
topology: v6e:2x2x1
jax: 0.10.0
libtpu: 0.0.40
codegen_flags: <defaults>
</compile_context>

<pallas_src>
import functools

import jax
import jax.numpy as jnp
from jax import lax
from jax.experimental import pallas as pl
from jax.experimental.pallas import tpu as pltpu


_LANE = 128
_SUBLANE = 8
_BLOCK_BUDGET_F32 = 2 * 1024 * 1024   # target f32-equivalent bytes per logits tile


def _divisors(n):
    return [d for d in range(1, n + 1) if n % d == 0]


def _pick_fold(H, W):
    """Fold g rows of W onto the lane axis so the minor dim is lane-dense."""
    if W % _LANE == 0:
        return 1
    best = 1
    for g in _divisors(H):
        L = g * W
        if L % _LANE == 0:
            return g            # smallest lane-aligned fold (keeps H//g large)
        if L <= 4 * _LANE:
            best = g            # fallback: biggest fold with a modest minor dim
    return best


def _pick_row_tile(H2, row_elems):
    """Largest st dividing H2 with st % 8 == 0 (or st == H2) within budget."""
    cands = [d for d in _divisors(H2) if d % _SUBLANE == 0] + [H2]
    fitting = [d for d in cands if d * row_elems * 4 <= _BLOCK_BUDGET_F32]
    return max(fitting) if fitting else min(cands)


def _pick_batch_tile(N, blk_elems):
    fitting = [d for d in _divisors(N) if d * blk_elems * 4 <= _BLOCK_BUDGET_F32]
    return max(fitting) if fitting else 1


def _fold_rows(a, sa):
    """Sum groups of `sa` rows along axis -2 (8-aligned static slices, pure VPU)."""
    st = a.shape[-2]
    if st == sa:
        return a
    acc = a[..., 0:sa, :]
    for k in range(1, st // sa):
        acc = acc + a[..., k * sa:(k + 1) * sa, :]
    return acc


def _dice_ce_kernel(x_ref, t_ref, inter_ref, card_ref, ce_ref, *, sa):
    @pl.when((pl.program_id(0) == 0) & (pl.program_id(1) == 0))
    def _init():
        inter_ref[...] = jnp.zeros_like(inter_ref)
        card_ref[...] = jnp.zeros_like(card_ref)
        ce_ref[...] = jnp.zeros_like(ce_ref)

    x = x_ref[...].astype(jnp.float32)            # (nt, C, st, L) logits
    t = t_ref[...]                                # (nt, st, L) int32 labels

    # softmax / log-softmax over the class axis.  Axis 1 is an *outer* vreg
    # axis here, so max/sum over it are plain VPU ops across C slabs.
    m = jnp.max(x, axis=1, keepdims=True)         # (nt, 1, st, L)
    xm = x - m
    e = jnp.exp(xm)                               # EUP
    s = jnp.sum(e, axis=1, keepdims=True)         # (nt, 1, st, L)
    p = e * pl.reciprocal(s, approx=False)        # EUP reciprocal, no f32 divide
    logp = xm - jnp.log(s)                        # log-softmax

    # one-hot of targets along the class axis
    onehot = (lax.broadcasted_iota(jnp.int32, x.shape, 1)
              == t[:, None, :, :]).astype(jnp.float32)   # (nt, C, st, L)

    # Lane-dense partial sums; only outer-axis reductions (VPU adds), no XLU.
    inter_blk = jnp.sum(p * onehot, axis=0)                     # (C, st, L)
    card_blk = jnp.sum(p, axis=0) + jnp.sum(onehot, axis=0)     # (C, st, L)
    nll_blk = jnp.sum(logp * onehot, axis=1).sum(axis=0)        # (st, L)

    inter_ref[...] += _fold_rows(inter_blk, sa)
    card_ref[...] += _fold_rows(card_blk, sa)
    ce_ref[...] += _fold_rows(nll_blk, sa)


def dice_ce_loss(inputs, targets):
    """inputs: (N, C, H, W) float logits; targets: (N, H, W) int labels."""
    N, C, H, W = inputs.shape

    # Free reshapes only (contiguous trailing dims): no transpose, no HBM upcast.
    g = _pick_fold(H, W)
    H2, L = H // g, g * W
    x = inputs.reshape(N, C, H2, L)
    t = targets.astype(jnp.int32).reshape(N, H2, L)

    st = _pick_row_tile(H2, C * L)                 # H2-rows per tile
    nt = _pick_batch_tile(N, C * st * L)           # batch samples per tile
    sa = _SUBLANE if st % _SUBLANE == 0 else st    # accumulator sublane depth
    grid = (N // nt, H2 // st)

    kernel = functools.partial(_dice_ce_kernel, sa=sa)

    inter, card, nll = pl.pallas_call(
        kernel,
        out_shape=(
            jax.ShapeDtypeStruct((C, sa, L), jnp.float32),   # intersection partial
            jax.ShapeDtypeStruct((C, sa, L), jnp.float32),   # cardinality partial
            jax.ShapeDtypeStruct((sa, L), jnp.float32),      # sum(logp*onehot) partial
        ),
        grid_spec=pltpu.PrefetchScalarGridSpec(
            num_scalar_prefetch=0,
            grid=grid,
            in_specs=[
                pl.BlockSpec((nt, C, st, L), lambda ni, hi: (ni, 0, hi, 0)),
                pl.BlockSpec((nt, st, L), lambda ni, hi: (ni, hi, 0)),
            ],
            out_specs=[
                pl.BlockSpec((C, sa, L), lambda ni, hi: (0, 0, 0)),
                pl.BlockSpec((C, sa, L), lambda ni, hi: (0, 0, 0)),
                pl.BlockSpec((sa, L), lambda ni, hi: (0, 0)),
            ],
        ),
        compiler_params=pltpu.CompilerParams(
            dimension_semantics=("arbitrary", "arbitrary"),
            vmem_limit_bytes=32 * 1024 * 1024,
        ),
    )(x, t)

    # Tiny final combine in XLA: collapse lane-dense partials back to (C, W)
    # (matching the original dims=(0, 2) dice reduction), then mix with CE.
    inter_cw = inter.sum(axis=1).reshape(C, g, W).sum(axis=1)
    card_cw = card.sum(axis=1).reshape(C, g, W).sum(axis=1)
    dice_loss = 1.0 - jnp.mean(2.0 * inter_cw / (card_cw + 1e-07))
    ce = -jnp.sum(nll) / (N * H * W)
    return 0.75 * ce + 0.25 * dice_loss


def dice_ce_loss_ref(inputs, targets):
    """Pure-JAX reference matching the PyTorch forward exactly."""
    N, C, H, W = inputs.shape
    probas = jax.nn.softmax(inputs, axis=1)
    onehot = jax.nn.one_hot(targets, C, axis=1, dtype=inputs.dtype)   # (N, C, H, W)
    dims = (0, 2)  # (0,) + range(2, targets.ndim) with targets.ndim == 3
    intersection = jnp.sum(probas * onehot, axis=dims)                # (C, W)
    cardinality = jnp.sum(probas + onehot, axis=dims)                 # (C, W)
    dice_loss = 1.0 - jnp.mean(2.0 * intersection / (cardinality + 1e-07))
    logp = jax.nn.log_softmax(inputs, axis=1)
    ce = -jnp.mean(jnp.sum(logp * onehot, axis=1))
    return 0.75 * ce + 0.25 * dice_loss


if __name__ == "__main__":
    key = jax.random.PRNGKey(0)
    k1, k2 = jax.random.split(key)
    N, C, H, W = 2, 4, 16, 16
    inputs = jax.random.normal(k1, (N, C, H, W), dtype=jnp.float32)
    targets = jax.random.randint(k2, (N, H, W), 0, C, dtype=jnp.int32)

    out = dice_ce_loss(inputs, targets)
    out = jax.block_until_ready(out)

    ref = dice_ce_loss_ref(inputs, targets)
    assert jnp.abs(out - ref) < 1e-4, (out, ref)
    print("KERNEL_OK")
</pallas_src>

<mosaic_0001>
module attributes {stable_mosaic.version = 11 : i64} {
  func.func @_dice_ce_kernel(%arg0: i32, %arg1: i32, %arg2: memref<2x4x2x128xf32, #tpu.memory_space<vmem>>, %arg3: memref<2x2x128xi32, #tpu.memory_space<vmem>>, %arg4: memref<4x2x128xf32, #tpu.memory_space<vmem>>, %arg5: memref<4x2x128xf32, #tpu.memory_space<vmem>>, %arg6: memref<2x128xf32, #tpu.memory_space<vmem>>) attributes {dimension_semantics = [#tpu.dimension_semantics<arbitrary>, #tpu.dimension_semantics<arbitrary>], iteration_bounds = array<i64: 1, 1>, scalar_prefetch = 0 : i64, scratch_operands = 0 : i64, tpu.core_type = #tpu.core_type<tc>, window_params = [{transform_indices = @transform_0, window_bounds = array<i64: 2, 4, 2, 128>}, {transform_indices = @transform_1, window_bounds = array<i64: 2, 2, 128>}, {pipeline_mode = #tpu.pipeline_mode<synchronous>, transform_indices = @transform_2, window_bounds = array<i64: 4, 2, 128>}, {pipeline_mode = #tpu.pipeline_mode<synchronous>, transform_indices = @transform_3, window_bounds = array<i64: 4, 2, 128>}, {pipeline_mode = #tpu.pipeline_mode<synchronous>, transform_indices = @transform_4, window_bounds = array<i64: 2, 128>}]} {
    %c0_i32 = arith.constant 0 : i32
    %0 = arith.cmpi eq, %arg0, %c0_i32 : i32
    %c0_i32_0 = arith.constant 0 : i32
    %1 = arith.cmpi eq, %arg1, %c0_i32_0 : i32
    %2 = arith.andi %0, %1 : i1
    %3 = arith.extui %2 : i1 to i32
    %c0_i32_1 = arith.constant 0 : i32
    %4 = arith.cmpi ne, %3, %c0_i32_1 : i32
    scf.if %4 {
      %cst_30 = arith.constant 0.000000e+00 : f32
      %43 = vector.broadcast %cst_30 : f32 to vector<4x2x128xf32>
      %c0_31 = arith.constant 0 : index
      %c0_32 = arith.constant 0 : index
      %c0_33 = arith.constant 0 : index
      %44 = vector.load %arg4[%c0_31, %c0_32, %c0_33] : memref<4x2x128xf32, #tpu.memory_space<vmem>>, vector<4x2x128xf32>
      tpu.vector_store %arg4[%c0_31, %c0_32, %c0_33], %43 {strides = array<i32>} : memref<4x2x128xf32, #tpu.memory_space<vmem>>, vector<4x2x128xf32>,
      %cst_34 = arith.constant 0.000000e+00 : f32
      %45 = vector.broadcast %cst_34 : f32 to vector<4x2x128xf32>
      %c0_35 = arith.constant 0 : index
      %c0_36 = arith.constant 0 : index
      %c0_37 = arith.constant 0 : index
      %46 = vector.load %arg5[%c0_35, %c0_36, %c0_37] : memref<4x2x128xf32, #tpu.memory_space<vmem>>, vector<4x2x128xf32>
      tpu.vector_store %arg5[%c0_35, %c0_36, %c0_37], %45 {strides = array<i32>} : memref<4x2x128xf32, #tpu.memory_space<vmem>>, vector<4x2x128xf32>,
      %cst_38 = arith.constant 0.000000e+00 : f32
      %47 = vector.broadcast %cst_38 : f32 to vector<2x128xf32>
      %c0_39 = arith.constant 0 : index
      %c0_40 = arith.constant 0 : index
      %48 = vector.load %arg6[%c0_39, %c0_40] : memref<2x128xf32, #tpu.memory_space<vmem>>, vector<2x128xf32>
      tpu.vector_store %arg6[%c0_39, %c0_40], %47 {strides = array<i32>} : memref<2x128xf32, #tpu.memory_space<vmem>>, vector<2x128xf32>,
    } else {
    }
    %c0 = arith.constant 0 : index
    %c0_2 = arith.constant 0 : index
    %c0_3 = arith.constant 0 : index
    %c0_4 = arith.constant 0 : index
    %5 = vector.load %arg2[%c0, %c0_2, %c0_3, %c0_4] : memref<2x4x2x128xf32, #tpu.memory_space<vmem>>, vector<2x4x2x128xf32>
    %c0_5 = arith.constant 0 : index
    %c0_6 = arith.constant 0 : index
    %c0_7 = arith.constant 0 : index
    %6 = vector.load %arg3[%c0_5, %c0_6, %c0_7] : memref<2x2x128xi32, #tpu.memory_space<vmem>>, vector<2x2x128xi32>
    %cst = arith.constant dense<0xFF800000> : vector<2x2x128xf32>
    %7 = vector.multi_reduction <maximumf>, %5, %cst [1] : vector<2x4x2x128xf32> to vector<2x2x128xf32>
    %8 = vector.shape_cast %7 : vector<2x2x128xf32> to vector<2x1x2x128xf32>
    %9 = vector.broadcast %8 : vector<2x1x2x128xf32> to vector<2x4x2x128xf32>
    %10 = arith.subf %5, %9 : vector<2x4x2x128xf32>
    %11 = math.exp %10 : vector<2x4x2x128xf32>
    %cst_8 = arith.constant dense<0.000000e+00> : vector<2x2x128xf32>
    %12 = vector.multi_reduction <add>, %11, %cst_8 [1] : vector<2x4x2x128xf32> to vector<2x2x128xf32>
    %13 = vector.shape_cast %12 : vector<2x2x128xf32> to vector<2x1x2x128xf32>
    %14 = tpu.reciprocal %13 : vector<2x1x2x128xf32> -> vector<2x1x2x128xf32>
    %15 = vector.broadcast %14 : vector<2x1x2x128xf32> to vector<2x4x2x128xf32>
    %16 = arith.mulf %11, %15 : vector<2x4x2x128xf32>
    %17 = math.log %13 : vector<2x1x2x128xf32>
    %18 = vector.broadcast %17 : vector<2x1x2x128xf32> to vector<2x4x2x128xf32>
    %19 = arith.subf %10, %18 : vector<2x4x2x128xf32>
    %20 = tpu.iota {dimensions = array<i32: 1>} : vector<2x4x2x128xi32>
    %21 = vector.shape_cast %6 : vector<2x2x128xi32> to vector<2x1x2x128xi32>
    %22 = vector.broadcast %21 : vector<2x1x2x128xi32> to vector<2x4x2x128xi32>
    %23 = arith.cmpi eq, %20, %22 : vector<2x4x2x128xi32>
    %24 = arith.extui %23 : vector<2x4x2x128xi1> to vector<2x4x2x128xi32>
    %25 = arith.sitofp %24 : vector<2x4x2x128xi32> to vector<2x4x2x128xf32>
    %26 = arith.mulf %16, %25 : vector<2x4x2x128xf32>
    %cst_9 = arith.constant dense<0.000000e+00> : vector<4x2x128xf32>
    %27 = vector.multi_reduction <add>, %26, %cst_9 [0] : vector<2x4x2x128xf32> to vector<4x2x128xf32>
    %cst_10 = arith.constant dense<0.000000e+00> : vector<4x2x128xf32>
    %28 = vector.multi_reduction <add>, %16, %cst_10 [0] : vector<2x4x2x128xf32> to vector<4x2x128xf32>
    %cst_11 = arith.constant dense<0.000000e+00> : vector<4x2x128xf32>
    %29 = vector.multi_reduction <add>, %25, %cst_11 [0] : vector<2x4x2x128xf32> to vector<4x2x128xf32>
    %30 = arith.addf %28, %29 : vector<4x2x128xf32>
    %31 = arith.mulf %19, %25 : vector<2x4x2x128xf32>
    %cst_12 = arith.constant dense<0.000000e+00> : vector<2x2x128xf32>
    %32 = vector.multi_reduction <add>, %31, %cst_12 [1] : vector<2x4x2x128xf32> to vector<2x2x128xf32>
    %cst_13 = arith.constant dense<0.000000e+00> : vector<2x128xf32>
    %33 = vector.multi_reduction <add>, %32, %cst_13 [0] : vector<2x2x128xf32> to vector<2x128xf32>
    %c0_14 = arith.constant 0 : index
    %c0_15 = arith.constant 0 : index
    %c0_16 = arith.constant 0 : index
    %34 = vector.load %arg4[%c0_14, %c0_15, %c0_16] : memref<4x2x128xf32, #tpu.memory_space<vmem>>, vector<4x2x128xf32>
    %35 = arith.addf %34, %27 : vector<4x2x128xf32>
    %c0_17 = arith.constant 0 : index
    %c0_18 = arith.constant 0 : index
    %c0_19 = arith.constant 0 : index
    %36 = vector.load %arg4[%c0_17, %c0_18, %c0_19] : memref<4x2x128xf32, #tpu.memory_space<vmem>>, vector<4x2x128xf32>
    tpu.vector_store %arg4[%c0_17, %c0_18, %c0_19], %35 {strides = array<i32>} : memref<4x2x128xf32, #tpu.memory_space<vmem>>, vector<4x2x128xf32>,
    %c0_20 = arith.constant 0 : index
    %c0_21 = arith.constant 0 : index
    %c0_22 = arith.constant 0 : index
    %37 = vector.load %arg5[%c0_20, %c0_21, %c0_22] : memref<4x2x128xf32, #tpu.memory_space<vmem>>, vector<4x2x128xf32>
    %38 = arith.addf %37, %30 : vector<4x2x128xf32>
    %c0_23 = arith.constant 0 : index
    %c0_24 = arith.constant 0 : index
    %c0_25 = arith.constant 0 : index
    %39 = vector.load %arg5[%c0_23, %c0_24, %c0_25] : memref<4x2x128xf32, #tpu.memory_space<vmem>>, vector<4x2x128xf32>
    tpu.vector_store %arg5[%c0_23, %c0_24, %c0_25], %38 {strides = array<i32>} : memref<4x2x128xf32, #tpu.memory_space<vmem>>, vector<4x2x128xf32>,
    %c0_26 = arith.constant 0 : index
    %c0_27 = arith.constant 0 : index
    %40 = vector.load %arg6[%c0_26, %c0_27] : memref<2x128xf32, #tpu.memory_space<vmem>>, vector<2x128xf32>
    %41 = arith.addf %40, %33 : vector<2x128xf32>
    %c0_28 = arith.constant 0 : index
    %c0_29 = arith.constant 0 : index
    %42 = vector.load %arg6[%c0_28, %c0_29] : memref<2x128xf32, #tpu.memory_space<vmem>>, vector<2x128xf32>
    tpu.vector_store %arg6[%c0_28, %c0_29], %41 {strides = array<i32>} : memref<2x128xf32, #tpu.memory_space<vmem>>, vector<2x128xf32>,
    return
  }
  func.func @transform_0(%arg0: i32, %arg1: i32) -> (i32, i32, i32, i32) {
    %c0_i32 = arith.constant 0 : i32
    %c0_i32_0 = arith.constant 0 : i32
    %c0_i32_1 = arith.constant 0 : i32
    return %arg0, %c0_i32, %arg1, %c0_i32_0 : i32, i32, i32, i32
  }
  func.func @transform_1(%arg0: i32, %arg1: i32) -> (i32, i32, i32) {
    %c0_i32 = arith.constant 0 : i32
    %c0_i32_0 = arith.constant 0 : i32
    return %arg0, %arg1, %c0_i32 : i32, i32, i32
  }
  func.func @transform_2(%arg0: i32, %arg1: i32) -> (i32, i32, i32) {
    %c0_i32 = arith.constant 0 : i32
    %c0_i32_0 = arith.constant 0 : i32
    %c0_i32_1 = arith.constant 0 : i32
    %c0_i32_2 = arith.constant 0 : i32
    return %c0_i32, %c0_i32_0, %c0_i32_1 : i32, i32, i32
  }
  func.func @transform_3(%arg0: i32, %arg1: i32) -> (i32, i32, i32) {
    %c0_i32 = arith.constant 0 : i32
    %c0_i32_0 = arith.constant 0 : i32
    %c0_i32_1 = arith.constant 0 : i32
    %c0_i32_2 = arith.constant 0 : i32
    return %c0_i32, %c0_i32_0, %c0_i32_1 : i32, i32, i32
  }
  func.func @transform_4(%arg0: i32, %arg1: i32) -> (i32, i32) {
    %c0_i32 = arith.constant 0 : i32
    %c0_i32_0 = arith.constant 0 : i32
    %c0_i32_1 = arith.constant 0 : i32
    return %c0_i32, %c0_i32_0 : i32, i32
  }
}

</mosaic_0001>

<llo_original>
// kernel: tpu_custom_call.1
$region0: #{tpu_custom_call.1}
  #allocation0 [shape = 'u32[]', space=smem, size = 0x4, offset = 0x4, fixed_abs, tag = 'smem constant byte address 0x4 - core index']
  #allocation1 [shape = 'u32[144,128]{1,0:T(1,128)}', space=vmem, size = 0x12000, scoped, tag = 'internal scratch']
  %s0 = inlined_call_operand.hbm [shape: f32[2,4,2,128], index: 0, kind: input, shape index: {}]
  %s1 = inlined_call_operand.hbm [shape: s32[2,2,128], index: 1, kind: input, shape index: {}]
  %s2 = inlined_call_operand.hbm [shape: f32[4,2,128], index: 2, kind: output, shape index: {0}]
  %s3 = inlined_call_operand.hbm [shape: f32[4,2,128], index: 3, kind: output, shape index: {1}]
  %s4 = inlined_call_operand.hbm [shape: f32[2,128], index: 4, kind: output, shape index: {2}]
  %5 = xla_tuple %s2, %s3, %s4
  %s6 = sld [smem:[#allocation0]]
  $region46: #{tpu_custom_call.1} parent=0
    _
  %s8 = ssub.s32 1, %s6
  %s9 = scalar_select 0, %s8, %s6
  $region1: #{tpu_custom_call.1} parent=0
    #allocation2 [shape = 'u8[8192]{0}', space=vmem, size = 0x2000, scoped, tag = 'input window, operand 0, single buffered']
    #allocation3 [shape = 's32[1]{0}', space=sflag, size = 0x4, scoped, tag = 'scoped memory for tpu_custom_call.1']
    #allocation4 [shape = 's32[1]{0}', space=sflag, size = 0x4, scoped, tag = 'scoped memory for tpu_custom_call.1']
    #allocation5 [shape = 'u8[2048]{0}', space=vmem, size = 0x800, scoped, tag = 'input window, operand 1, single buffered']
    #allocation6 [shape = 's32[1]{0}', space=sflag, size = 0x4, scoped, tag = 'scoped memory for tpu_custom_call.1']
    #allocation7 [shape = 'u8[4096]{0}', space=vmem, size = 0x1000, scoped, tag = 'output window, operand 0, single buffered']
    #allocation8 [shape = 'u8[4096]{0}', space=vmem, size = 0x1000, scoped, tag = 'output window, operand 1, single buffered']
    #allocation9 [shape = 's32[1]{0}', space=sflag, size = 0x4, scoped, tag = 'scoped memory for tpu_custom_call.1']
    #allocation10 [shape = 'u8[1024]{0}', space=vmem, size = 0x400, scoped, tag = 'output window, operand 2, single buffered']
    %10 = vsyncpa [#allocation3], 0
    %11 = vsyncpa [#allocation6], 0
    %12 = vsyncpa [#allocation4], 0
    %13 = vsyncpa [#allocation9], 0
    // Predicated region
    $region2: #{tpu_custom_call.1} parent=1 // pred_check
      _
    $region3: #{tpu_custom_call.1} parent=1 // pred_check_branch
      %15 = sbr.rel (0) target = $region5
    $region4: #{tpu_custom_call.1} parent=1 // pred_region
      %s17 = ssub.s32 256, 256
      %18 = vsyncadd [#allocation3], %s17
      %s19 = sshll.u32 [#allocation2], 4
      %s20 = int_to_ptr.vmem [resolvable:$true] %s19
      %25 = dma.hbm_to_vmem [thread:$0]  %s0, 256, %s20, [#allocation3], 32, 32, 2
    $region5: #{tpu_custom_call.1} parent=1 // pred_fallthru
      _
    // Predicated region
    $region6: #{tpu_custom_call.1} parent=1 // pred_check
      _
    $region7: #{tpu_custom_call.1} parent=1 // pred_check_branch
      %27 = sbr.rel (0) target = $region9
    $region8: #{tpu_custom_call.1} parent=1 // pred_region
      %s29 = ssub.s32 64, 64
      %30 = vsyncadd [#allocation6], %s29
      %s31 = sshll.u32 [#allocation5], 4
      %s32 = int_to_ptr.vmem [resolvable:$true] %s31
      %37 = dma.hbm_to_vmem [thread:$0]  %s1, 64, %s32, [#allocation6], 32, 32, 2
    $region9: #{tpu_custom_call.1} parent=1 // pred_fallthru
      _
    // Predicated region
    $region10: #{tpu_custom_call.1} parent=1 // pred_check
      _
    $region11: #{tpu_custom_call.1} parent=1 // pred_check_branch
      %39 = sbr.rel (0) target = $region13
    $region12: #{tpu_custom_call.1} parent=1 // pred_region
      %40 = dma.done [#allocation3], 256
    $region13: #{tpu_custom_call.1} parent=1 // pred_fallthru
      _
    // Predicated region
    $region14: #{tpu_custom_call.1} parent=1 // pred_check
      _
    $region15: #{tpu_custom_call.1} parent=1 // pred_check_branch
      %42 = sbr.rel (0) target = $region17
    $region16: #{tpu_custom_call.1} parent=1 // pred_region
      %43 = dma.done [#allocation6], 64
    $region17: #{tpu_custom_call.1} parent=1 // pred_fallthru
      _
    %p44 = scmp.eq.s32.totalorder 0, 0
    %p45 = scmp.eq.s32.totalorder 0, 0
    %p46 = pnand %p44, %p45
    %p47 = pneg %p46
    // Predicated region
    $region18: #{tpu_custom_call.1} parent=1 // pred_check
      _
    $region19: #{tpu_custom_call.1} parent=1 // pred_check_branch
      %49 = sbr.rel (%p46) target = $region21
    $region20: #{tpu_custom_call.1} parent=1 // pred_region
      %50 = vst [vmem:[#allocation7] sm:$0x3] 0.0
      %51 = vst [vmem:[#allocation7 + $0x2] sm:$0x3] 0.0
      %52 = vst [vmem:[#allocation7 + $0x4] sm:$0x3] 0.0
      %53 = vst [vmem:[#allocation7 + $0x6] sm:$0x3] 0.0
      %54 = vst [vmem:[#allocation8] sm:$0x3] 0.0
      %55 = vst [vmem:[#allocation8 + $0x2] sm:$0x3] 0.0
      %56 = vst [vmem:[#allocation8 + $0x4] sm:$0x3] 0.0
      %57 = vst [vmem:[#allocation8 + $0x6] sm:$0x3] 0.0
      %58 = vst [vmem:[#allocation10] sm:$0x3] 0.0
    $region21: #{tpu_custom_call.1} parent=1 // pred_fallthru
      _
    %v59 = vld [vmem:[#allocation2] sm:$0x3]
    %v60 = vld [vmem:[#allocation2 + $0x2] sm:$0x3]
    %v61 = vld [vmem:[#allocation2 + $0x4] sm:$0x3]
    %v62 = vld [vmem:[#allocation2 + $0x6] sm:$0x3]
    %v63 = vld [vmem:[#allocation2 + $0x8] sm:$0x3]
    %v64 = vld [vmem:[#allocation2 + $0xa] sm:$0x3]
    %v65 = vld [vmem:[#allocation2 + $0xc] sm:$0x3]
    %v66 = vld [vmem:[#allocation2 + $0xe] sm:$0x3]
    %v67 = vld [vmem:[#allocation5] sm:$0x3]
    %v68 = vld [vmem:[#allocation5 + $0x2] sm:$0x3]
    %vm69 = vcmask 1041408
    %v70 = vsel %vm69, %v59, -inf
    %v71 = vsel %vm69, %v60, -inf
    %v72 = vsel %vm69, %v61, -inf
    %v73 = vmax.f32 %v70, %v72
    %v74 = vsel %vm69, %v62, -inf
    %v75 = vmax.f32 %v71, %v74
    %v76 = vmax.f32 %v73, %v75
    %v77 = vsel %vm69, %v63, -inf
    %v78 = vsel %vm69, %v64, -inf
    %v79 = vsel %vm69, %v65, -inf
    %v80 = vmax.f32 %v77, %v79
    %v81 = vsel %vm69, %v66, -inf
    %v82 = vmax.f32 %v78, %v81
    %v83 = vmax.f32 %v80, %v82
    %v84 = vsub.f32 %v59, %v76
    %v85 = vsub.f32 %v60, %v76
    %v86 = vsub.f32 %v61, %v76
    %v87 = vsub.f32 %v62, %v76
    %v88 = vsub.f32 %v63, %v83
    %v89 = vsub.f32 %v64, %v83
    %v90 = vsub.f32 %v65, %v83
    %v91 = vsub.f32 %v66, %v83
    %v92 = vmul.f32 %v84, 1.442695
    %v93 = vpow.pop %v92
    %v94 = vmul.f32 %v85, 1.442695
    %v95 = vpow.pop %v94
    %v96 = vmul.f32 %v86, 1.442695
    %v97 = vpow.pop %v96
    %v98 = vmul.f32 %v87, 1.442695
    %v99 = vpow.pop %v98
    %v100 = vmul.f32 %v88, 1.442695
    %v101 = vpow.pop %v100
    %v102 = vmul.f32 %v89, 1.442695
    %v103 = vpow.pop %v102
    %v104 = vmul.f32 %v90, 1.442695
    %v105 = vpow.pop %v104
    %v106 = vmul.f32 %v91, 1.442695
    %v107 = vpow.pop %v106
    %v108 = vsel %vm69, %v93, 0.0
    %v109 = vsel %vm69, %v95, 0.0
    %v110 = vadd.f32 %v108, %v109
    %v111 = vsel %vm69, %v97, 0.0
    %v112 = vadd.f32 %v110, %v111
    %v113 = vsel %vm69, %v99, 0.0
    %v114 = vadd.f32 %v112, %v113
    %v115 = vsel %vm69, %v101, 0.0
    %v116 = vsel %vm69, %v103, 0.0
    %v117 = vadd.f32 %v115, %v116
    %v118 = vsel %vm69, %v105, 0.0
    %v119 = vadd.f32 %v117, %v118
    %v120 = vsel %vm69, %v107, 0.0
    %v121 = vadd.f32 %v119, %v120
    %v122 = vrcp.pop %v114
    %v123 = vrcp.pop %v121
    %v124 = vmul.f32 %v93, %v122
    %v125 = vmul.f32 %v95, %v122
    %v126 = vmul.f32 %v97, %v122
    %v127 = vmul.f32 %v99, %v122
    %v128 = vmul.f32 %v101, %v123
    %v129 = vmul.f32 %v103, %v123
    %v130 = vmul.f32 %v105, %v123
    %v131 = vmul.f32 %v107, %v123
    %v132 = vlog2.pop %v114
    %v133 = vmul.f32 %v132, 0.6931472
    %v134 = vlog2.pop %v121
    %v135 = vmul.f32 %v134, 0.6931472
    %v136 = vsub.f32 %v84, %v133
    %v137 = vsub.f32 %v85, %v133
    %v138 = vsub.f32 %v86, %v133
    %v139 = vsub.f32 %v87, %v133
    %v140 = vsub.f32 %v88, %v135
    %v141 = vsub.f32 %v89, %v135
    %v142 = vsub.f32 %v90, %v135
    %v143 = vsub.f32 %v91, %v135
    %vm144 = vcmp.eq.s32.totalorder %v67, 0
    %vm145 = vcmp.eq.s32.totalorder %v67, 1
    %vm146 = vcmp.eq.s32.totalorder %v67, 2
    %vm147 = vcmp.eq.s32.totalorder %v67, 3
    %vm148 = vcmp.eq.s32.totalorder %v68, 0
    %vm149 = vcmp.eq.s32.totalorder %v68, 1
    %vm150 = vcmp.eq.s32.totalorder %v68, 2
    %vm151 = vcmp.eq.s32.totalorder %v68, 3
    %v152 = vsel %vm144, 1, 0
    %v153 = vsel %vm145, 1, 0
    %v154 = vsel %vm146, 1, 0
    %v155 = vsel %vm147, 1, 0
    %v156 = vsel %vm148, 1, 0
    %v157 = vsel %vm149, 1, 0
    %v158 = vsel %vm150, 1, 0
    %v159 = vsel %vm151, 1, 0
    %v160 = vcvt.s32.f32 %v152
    %v161 = vcvt.s32.f32 %v153
    %v162 = vcvt.s32.f32 %v154
    %v163 = vcvt.s32.f32 %v155
    %v164 = vcvt.s32.f32 %v156
    %v165 = vcvt.s32.f32 %v157
    %v166 = vcvt.s32.f32 %v158
    %v167 = vcvt.s32.f32 %v159
    %v168 = vmul.f32 %v124, %v160
    %v169 = vmul.f32 %v125, %v161
    %v170 = vmul.f32 %v126, %v162
    %v171 = vmul.f32 %v127, %v163
    %v172 = vmul.f32 %v128, %v164
    %v173 = vmul.f32 %v129, %v165
    %v174 = vmul.f32 %v130, %v166
    %v175 = vmul.f32 %v131, %v167
    %v176 = vsel %vm69, %v168, 0.0
    %v177 = vsel %vm69, %v172, 0.0
    %v178 = vadd.f32 %v176, %v177
    %v179 = vsel %vm69, %v169, 0.0
    %v180 = vsel %vm69, %v173, 0.0
    %v181 = vadd.f32 %v179, %v180
    %v182 = vsel %vm69, %v170, 0.0
    %v183 = vsel %vm69, %v174, 0.0
    %v184 = vadd.f32 %v182, %v183
    %v185 = vsel %vm69, %v171, 0.0
    %v186 = vsel %vm69, %v175, 0.0
    %v187 = vadd.f32 %v185, %v186
    %v188 = vsel %vm69, %v124, 0.0
    %v189 = vsel %vm69, %v128, 0.0
    %v190 = vadd.f32 %v188, %v189
    %v191 = vsel %vm69, %v125, 0.0
    %v192 = vsel %vm69, %v129, 0.0
    %v193 = vadd.f32 %v191, %v192
    %v194 = vsel %vm69, %v126, 0.0
    %v195 = vsel %vm69, %v130, 0.0
    %v196 = vadd.f32 %v194, %v195
    %v197 = vsel %vm69, %v127, 0.0
    %v198 = vsel %vm69, %v131, 0.0
    %v199 = vadd.f32 %v197, %v198
    %v200 = vsel %vm69, %v160, 0.0
    %v201 = vsel %vm69, %v164, 0.0
    %v202 = vadd.f32 %v200, %v201
    %v203 = vsel %vm69, %v161, 0.0
    %v204 = vsel %vm69, %v165, 0.0
    %v205 = vadd.f32 %v203, %v204
    %v206 = vsel %vm69, %v162, 0.0
    %v207 = vsel %vm69, %v166, 0.0
    %v208 = vadd.f32 %v206, %v207
    %v209 = vsel %vm69, %v163, 0.0
    %v210 = vsel %vm69, %v167, 0.0
    %v211 = vadd.f32 %v209, %v210
    %v212 = vadd.f32 %v190, %v202
    %v213 = vadd.f32 %v193, %v205
    %v214 = vadd.f32 %v196, %v208
    %v215 = vadd.f32 %v199, %v211
    %v216 = vmul.f32 %v136, %v160
    %v217 = vmul.f32 %v137, %v161
    %v218 = vmul.f32 %v138, %v162
    %v219 = vmul.f32 %v139, %v163
    %v220 = vmul.f32 %v140, %v164
    %v221 = vmul.f32 %v141, %v165
    %v222 = vmul.f32 %v142, %v166
    %v223 = vmul.f32 %v143, %v167
    %v224 = vsel %vm69, %v216, 0.0
    %v225 = vsel %vm69, %v217, 0.0
    %v226 = vadd.f32 %v224, %v225
    %v227 = vsel %vm69, %v218, 0.0
    %v228 = vadd.f32 %v226, %v227
    %v229 = vsel %vm69, %v219, 0.0
    %v230 = vadd.f32 %v228, %v229
    %v231 = vsel %vm69, %v220, 0.0
    %v232 = vsel %vm69, %v221, 0.0
    %v233 = vadd.f32 %v231, %v232
    %v234 = vsel %vm69, %v222, 0.0
    %v235 = vadd.f32 %v233, %v234
    %v236 = vsel %vm69, %v223, 0.0
    %v237 = vadd.f32 %v235, %v236
    %v238 = vsel %vm69, %v230, 0.0
    %v239 = vsel %vm69, %v237, 0.0
    %v240 = vadd.f32 %v238, %v239
    %v241 = vld [vmem:[#allocation7] sm:$0x3]
    %v242 = vld [vmem:[#allocation7 + $0x2] sm:$0x3]
    %v243 = vld [vmem:[#allocation7 + $0x4] sm:$0x3]
    %v244 = vld [vmem:[#allocation7 + $0x6] sm:$0x3]
    %v245 = vadd.f32 %v241, %v178
    %v246 = vadd.f32 %v242, %v181
    %v247 = vadd.f32 %v243, %v184
    %v248 = vadd.f32 %v244, %v187
    %249 = vst [vmem:[#allocation7] sm:$0x3] %v245
    %250 = vst [vmem:[#allocation7 + $0x2] sm:$0x3] %v246
    %251 = vst [vmem:[#allocation7 + $0x4] sm:$0x3] %v247
    %252 = vst [vmem:[#allocation7 + $0x6] sm:$0x3] %v248
    %v253 = vld [vmem:[#allocation8] sm:$0x3]
    %v254 = vld [vmem:[#allocation8 + $0x2] sm:$0x3]
    %v255 = vld [vmem:[#allocation8 + $0x4] sm:$0x3]
    %v256 = vld [vmem:[#allocation8 + $0x6] sm:$0x3]
    %v257 = vadd.f32 %v253, %v212
    %v258 = vadd.f32 %v254, %v213
    %v259 = vadd.f32 %v255, %v214
    %v260 = vadd.f32 %v256, %v215
    %261 = vst [vmem:[#allocation8] sm:$0x3] %v257
    %262 = vst [vmem:[#allocation8 + $0x2] sm:$0x3] %v258
    %263 = vst [vmem:[#allocation8 + $0x4] sm:$0x3] %v259
    %264 = vst [vmem:[#allocation8 + $0x6] sm:$0x3] %v260
    %v265 = vld [vmem:[#allocation10] sm:$0x3]
    %v266 = vadd.f32 %v265, %v240
    %267 = vst [vmem:[#allocation10] sm:$0x3] %v266
    // Predicated region
    $region22: #{tpu_custom_call.1} parent=1 // pred_check
      _
    $region23: #{tpu_custom_call.1} parent=1 // pred_check_branch
      %269 = sbr.rel (0) target = $region25
    $region24: #{tpu_custom_call.1} parent=1 // pred_region
      %s271 = ssub.s32 128, 128
      %272 = vsyncadd [#allocation4], %s271
      %s273 = sshll.u32 [#allocation7], 4
      %s274 = int_to_ptr.vmem [resolvable:$true] %s273
      %279 = dma.vmem_to_hbm [thread:$0]  %s274, 128, %s2, [#allocation4], 32, 32, 2
    $region25: #{tpu_custom_call.1} parent=1 // pred_fallthru
      _
    // Predicated region
    $region26: #{tpu_custom_call.1} parent=1 // pred_check
      _
    $region27: #{tpu_custom_call.1} parent=1 // pred_check_branch
      %281 = sbr.rel (0) target = $region29
    $region28: #{tpu_custom_call.1} parent=1 // pred_region
      %s283 = ssub.s32 128, 128
      %284 = vsyncadd [#allocation9], %s283
      %s285 = sshll.u32 [#allocation8], 4
      %s286 = int_to_ptr.vmem [resolvable:$true] %s285
      %291 = dma.vmem_to_hbm [thread:$0]  %s286, 128, %s3, [#allocation9], 32, 32, 2
    $region29: #{tpu_custom_call.1} parent=1 // pred_fallthru
      _
    // Predicated region
    $region30: #{tpu_custom_call.1} parent=1 // pred_check
      _
    $region31: #{tpu_custom_call.1} parent=1 // pred_check_branch
      %293 = sbr.rel (0) target = $region33
    $region32: #{tpu_custom_call.1} parent=1 // pred_region
      %s295 = ssub.s32 32, 32
      %296 = vsyncadd [#allocation9], %s295
      %s298 = sshll.u32 [#allocation10], 4
      %s299 = int_to_ptr.vmem [resolvable:$true] %s298
      %301 = dma.vmem_to_hbm [thread:$0]  %s299, 32, %s4, [#allocation9]
    $region33: #{tpu_custom_call.1} parent=1 // pred_fallthru
      _
    // Predicated region
    $region34: #{tpu_custom_call.1} parent=1 // pred_check
      _
    $region35: #{tpu_custom_call.1} parent=1 // pred_check_branch
      %303 = sbr.rel (0) target = $region37
    $region36: #{tpu_custom_call.1} parent=1 // pred_region
      %304 = dma.done [#allocation4], 128
    $region37: #{tpu_custom_call.1} parent=1 // pred_fallthru
      _
    // Predicated region
    $region38: #{tpu_custom_call.1} parent=1 // pred_check
      _
    $region39: #{tpu_custom_call.1} parent=1 // pred_check_branch
      %306 = sbr.rel (0) target = $region41
    $region40: #{tpu_custom_call.1} parent=1 // pred_region
      %307 = dma.done [#allocation9], 128
    $region41: #{tpu_custom_call.1} parent=1 // pred_fallthru
      _
    // Predicated region
    $region42: #{tpu_custom_call.1} parent=1 // pred_check
      _
    $region43: #{tpu_custom_call.1} parent=1 // pred_check_branch
      %309 = sbr.rel (0) target = $region45
    $region44: #{tpu_custom_call.1} parent=1 // pred_region
      %310 = dma.done [#allocation9], 32
    $region45: #{tpu_custom_call.1} parent=1 // pred_fallthru
      _
    %311 = vsyncpa [#allocation3], 1
    %312 = vsyncpa [#allocation6], 1
    %313 = vsyncpa [#allocation4], 1
    %314 = vsyncpa [#allocation9], 1

</llo_original>
